<compile_context>
chip_gen: v5e
topology: v5e:2x2
jax: 0.10.0
libtpu: 0.0.40
codegen_flags: <defaults>
</compile_context>

<pallas_src>
import functools

import jax
import jax.numpy as jnp
from jax.experimental import pallas as pl
from jax.experimental.pallas import tpu as pltpu


def _cdiv(a, b):
    return (a + b - 1) // b


def _round_up(x, m):
    return ((x + m - 1) // m) * m


def _choose_batch_tile(batch, block_b):
    """Pick (TB, Bp) for the batch grid.

    * TB is a multiple of 8 sublanes, capped near block_b.
    * Tiles are balanced (TB = round_up(cdiv(B, n_tiles), 8)) so total padding
      is bounded by ~8 rows per tile instead of up to a full tile.
    * Grid length is forced to >= 2 whenever the batch allows it so both v7x
      TensorCores get work (no-op on single-core v5e/v6e).
    """
    b8 = _round_up(batch, 8)
    n_tiles = _cdiv(b8, block_b)
    if b8 >= 16:
        n_tiles = max(n_tiles, 2)
    tb = _round_up(_cdiv(b8, n_tiles), 8)
    bp = _round_up(b8, tb)
    return tb, bp


def qnet_kernel(x_ref, w1_ref, w23_ref, b_ref, o_ref):
    # x_ref:   (TB, K)      activation tile (pipelined over the batch grid)
    # w1_ref:  (K, H)       first-layer weight, lane-padded to H=128
    # w23_ref: (2, H, H)    stacked, lane-padded w2 / w3
    # b_ref:   (3, 1, H)    stacked, lane-padded biases (always f32)
    # o_ref:   (TB, A)      narrow logits tile (A = action_size)
    cdt = w1_ref.dtype                      # MXU operand dtype (f32 or bf16)
    a = o_ref.shape[-1]

    x = x_ref[...].astype(cdt)
    h1 = jnp.dot(x, w1_ref[...], preferred_element_type=jnp.float32) + b_ref[0]
    h1 = jnp.maximum(h1, 0.0)               # ReLU in f32

    h2 = jnp.dot(h1.astype(cdt), w23_ref[0],
                 preferred_element_type=jnp.float32) + b_ref[1]
    h2 = jnp.maximum(h2, 0.0)

    logits = (jnp.dot(h2.astype(cdt), w23_ref[1],
                      preferred_element_type=jnp.float32) + b_ref[2])
    # Narrow store: only the real action lanes go back to HBM.
    o_ref[...] = logits[:, :a].astype(o_ref.dtype)


@functools.partial(jax.jit, static_argnames=("action_size", "block_b"))
def qnetwork_forward(x, packed_params, action_size, *, block_b=1024):
    """x: (B, state_size) f32.  Returns (B, action_size) f32 logits."""
    w1p, w23p, bp_ = packed_params
    B, K = x.shape
    H = w1p.shape[1]                        # 128 (lane-padded hidden dim)

    TB, Bp = _choose_batch_tile(B, block_b)
    if Bp != B:
        x = jnp.pad(x, ((0, Bp - B), (0, 0)))   # zero rows; sliced off below
    grid = (Bp // TB,)

    out = pl.pallas_call(
        qnet_kernel,
        out_shape=jax.ShapeDtypeStruct((Bp, action_size), jnp.float32),
        grid_spec=pltpu.PrefetchScalarGridSpec(
            num_scalar_prefetch=0,
            grid=grid,
            in_specs=[
                pl.BlockSpec((TB, K), lambda i: (i, 0)),        # activations: tiled
                pl.BlockSpec((K, H), lambda i: (0, 0)),         # weights: constant
                pl.BlockSpec((2, H, H), lambda i: (0, 0, 0)),   #   index_maps ->
                pl.BlockSpec((3, 1, H), lambda i: (0, 0, 0)),   #   VMEM-resident
            ],
            # Narrow output block: last dim == full array dim (legal), 32x fewer
            # HBM writeback bytes than a 128-lane-padded slab.
            out_specs=pl.BlockSpec((TB, action_size), lambda i: (i, 0)),
        ),
        compiler_params=pltpu.CompilerParams(
            dimension_semantics=("parallel",),                  # megacore on v7x
        ),
    )(x, w1p, w23p, bp_)

    return out[:B] if Bp != B else out


def init_qnet_params(key, state_size, action_size, hidden=24):
    """PyTorch nn.Linear default init: U(-1/sqrt(fan_in), 1/sqrt(fan_in))."""
    ks = jax.random.split(key, 6)

    def lin(kw, kb, fan_in, fan_out):
        bound = 1.0 / (fan_in ** 0.5)
        w = jax.random.uniform(kw, (fan_in, fan_out), jnp.float32, -bound, bound)
        b = jax.random.uniform(kb, (fan_out,), jnp.float32, -bound, bound)
        return w, b

    w1, b1 = lin(ks[0], ks[1], state_size, hidden)
    w2, b2 = lin(ks[2], ks[3], hidden, hidden)
    w3, b3 = lin(ks[4], ks[5], hidden, action_size)
    return (w1, b1, w2, b2, w3, b3)


def pack_qnet_params(raw, action_size, lane_pad=128, param_dtype=jnp.float32):
    """Zero-pad hidden/action dims to `lane_pad` lanes and coalesce the 6 param
    tensors into 3 DMA buffers.  Zero padding keeps padded lanes exactly 0
    through ReLU, so the real lanes are exact."""
    w1, b1, w2, b2, w3, b3 = raw
    state_size, hidden = w1.shape
    assert max(hidden, action_size) <= lane_pad
    H = lane_pad

    w1p = jnp.zeros((state_size, H), jnp.float32).at[:, :hidden].set(w1)
    w2p = jnp.zeros((H, H), jnp.float32).at[:hidden, :hidden].set(w2)
    w3p = jnp.zeros((H, H), jnp.float32).at[:hidden, :action_size].set(w3)
    bp = jnp.zeros((3, 1, H), jnp.float32)
    bp = (bp.at[0, 0, :hidden].set(b1)
            .at[1, 0, :hidden].set(b2)
            .at[2, 0, :action_size].set(b3))

    return (w1p.astype(param_dtype),
            jnp.stack([w2p, w3p]).astype(param_dtype),
            bp)                                  # biases stay f32


if __name__ == "__main__":
    state_size = 8      # e.g. LunarLander-style observation
    action_size = 4
    batch = 2

    key = jax.random.PRNGKey(0)
    k_x, k_p, k_big = jax.random.split(key, 3)
    x = jax.random.normal(k_x, (batch, state_size), jnp.float32)

    raw = init_qnet_params(k_p, state_size, action_size)
    packed_f32 = pack_qnet_params(raw, action_size, param_dtype=jnp.float32)

    w1, b1, w2, b2, w3, b3 = raw

    def ref_fwd(xx):
        h = jnp.maximum(xx @ w1 + b1, 0.0)
        h = jnp.maximum(h @ w2 + b2, 0.0)
        return h @ w3 + b3

    # 1) Small batch: exact check, single tile (grid=(1,)).
    out = jax.block_until_ready(
        qnetwork_forward(x, packed_f32, action_size=action_size))
    assert out.shape == (batch, action_size)
    assert jnp.allclose(out, ref_fwd(x), atol=1e-5, rtol=1e-5)

    # 2) Odd multi-tile batch: exercises the balanced batch grid (3 parallel
    #    tiles of 688 rows) and the cheap narrow row-slice of padded rows.
    xb = jax.random.normal(k_big, (2050, state_size), jnp.float32)
    outb = jax.block_until_ready(
        qnetwork_forward(xb, packed_f32, action_size=action_size))
    assert outb.shape == (2050, action_size)
    assert jnp.allclose(outb, ref_fwd(xb), atol=1e-5, rtol=1e-5)

    # 3) bf16 weight path (v6e/v7x MXU-native); accumulation stays f32 in-kernel,
    #    so compare against the f32 reference with a loosened tolerance.
    packed_bf16 = pack_qnet_params(raw, action_size, param_dtype=jnp.bfloat16)
    xh = xb[:256]
    outh = jax.block_until_ready(
        qnetwork_forward(xh, packed_bf16, action_size=action_size))
    assert outh.shape == (256, action_size)
    assert jnp.allclose(outh, ref_fwd(xh), atol=5e-2, rtol=5e-2)

    print("KERNEL_OK")
</pallas_src>

<mosaic_0001>
module attributes {stable_mosaic.version = 11 : i64} {
  func.func @qnet_kernel(%arg0: i32, %arg1: memref<8x8xf32, #tpu.memory_space<vmem>>, %arg2: memref<8x128xf32, #tpu.memory_space<vmem>>, %arg3: memref<2x128x128xf32, #tpu.memory_space<vmem>>, %arg4: memref<3x1x128xf32, #tpu.memory_space<vmem>>, %arg5: memref<8x4xf32, #tpu.memory_space<vmem>>) attributes {dimension_semantics = [#tpu.dimension_semantics<parallel>], iteration_bounds = array<i64: 1>, scalar_prefetch = 0 : i64, scratch_operands = 0 : i64, tpu.core_type = #tpu.core_type<tc>, window_params = [{transform_indices = @transform_0, window_bounds = array<i64: 8, 8>}, {pipeline_mode = #tpu.pipeline_mode<synchronous>, transform_indices = @transform_1, window_bounds = array<i64: 8, 128>}, {pipeline_mode = #tpu.pipeline_mode<synchronous>, transform_indices = @transform_2, window_bounds = array<i64: 2, 128, 128>}, {pipeline_mode = #tpu.pipeline_mode<synchronous>, transform_indices = @transform_3, window_bounds = array<i64: 3, 1, 128>}, {transform_indices = @transform_4, window_bounds = array<i64: 8, 4>}]} {
    %c0 = arith.constant 0 : index
    %c0_0 = arith.constant 0 : index
    %0 = vector.load %arg1[%c0, %c0_0] : memref<8x8xf32, #tpu.memory_space<vmem>>, vector<8x8xf32>
    %c0_1 = arith.constant 0 : index
    %c0_2 = arith.constant 0 : index
    %1 = vector.load %arg2[%c0_1, %c0_2] : memref<8x128xf32, #tpu.memory_space<vmem>>, vector<8x128xf32>
    %cst = arith.constant dense<0.000000e+00> : vector<8x128xf32>
    %2 = tpu.matmul %0, %1, %cst {dimension_numbers = #tpu.dot_dimension_numbers<[1], [0], [0], [1], [0, 0, 1, 1], [], []>} : vector<8x8xf32>, vector<8x128xf32>, vector<8x128xf32> -> vector<8x128xf32>
    %c0_3 = arith.constant 0 : index
    %c0_4 = arith.constant 0 : index
    %c0_5 = arith.constant 0 : index
    %3 = vector.load %arg4[%c0_3, %c0_4, %c0_5] : memref<3x1x128xf32, #tpu.memory_space<vmem>>, vector<1x1x128xf32>
    %4 = vector.shape_cast %3 : vector<1x1x128xf32> to vector<1x128xf32>
    %5 = vector.broadcast %4 : vector<1x128xf32> to vector<8x128xf32>
    %6 = arith.addf %2, %5 : vector<8x128xf32>
    %cst_6 = arith.constant 0.000000e+00 : f32
    %7 = vector.broadcast %cst_6 : f32 to vector<8x128xf32>
    %8 = arith.maximumf %6, %7 : vector<8x128xf32>
    %c0_7 = arith.constant 0 : index
    %c0_8 = arith.constant 0 : index
    %c0_9 = arith.constant 0 : index
    %9 = vector.load %arg3[%c0_7, %c0_8, %c0_9] : memref<2x128x128xf32, #tpu.memory_space<vmem>>, vector<1x128x128xf32>
    %10 = vector.shape_cast %9 : vector<1x128x128xf32> to vector<128x128xf32>
    %cst_10 = arith.constant dense<0.000000e+00> : vector<8x128xf32>
    %11 = tpu.matmul %8, %10, %cst_10 {dimension_numbers = #tpu.dot_dimension_numbers<[1], [0], [0], [1], [0, 0, 1, 1], [], []>} : vector<8x128xf32>, vector<128x128xf32>, vector<8x128xf32> -> vector<8x128xf32>
    %c1 = arith.constant 1 : index
    %c0_11 = arith.constant 0 : index
    %c0_12 = arith.constant 0 : index
    %12 = vector.load %arg4[%c1, %c0_11, %c0_12] : memref<3x1x128xf32, #tpu.memory_space<vmem>>, vector<1x1x128xf32>
    %13 = vector.shape_cast %12 : vector<1x1x128xf32> to vector<1x128xf32>
    %14 = vector.broadcast %13 : vector<1x128xf32> to vector<8x128xf32>
    %15 = arith.addf %11, %14 : vector<8x128xf32>
    %cst_13 = arith.constant 0.000000e+00 : f32
    %16 = vector.broadcast %cst_13 : f32 to vector<8x128xf32>
    %17 = arith.maximumf %15, %16 : vector<8x128xf32>
    %c1_14 = arith.constant 1 : index
    %c0_15 = arith.constant 0 : index
    %c0_16 = arith.constant 0 : index
    %18 = vector.load %arg3[%c1_14, %c0_15, %c0_16] : memref<2x128x128xf32, #tpu.memory_space<vmem>>, vector<1x128x128xf32>
    %19 = vector.shape_cast %18 : vector<1x128x128xf32> to vector<128x128xf32>
    %cst_17 = arith.constant dense<0.000000e+00> : vector<8x128xf32>
    %20 = tpu.matmul %17, %19, %cst_17 {dimension_numbers = #tpu.dot_dimension_numbers<[1], [0], [0], [1], [0, 0, 1, 1], [], []>} : vector<8x128xf32>, vector<128x128xf32>, vector<8x128xf32> -> vector<8x128xf32>
    %c2 = arith.constant 2 : index
    %c0_18 = arith.constant 0 : index
    %c0_19 = arith.constant 0 : index
    %21 = vector.load %arg4[%c2, %c0_18, %c0_19] : memref<3x1x128xf32, #tpu.memory_space<vmem>>, vector<1x1x128xf32>
    %22 = vector.shape_cast %21 : vector<1x1x128xf32> to vector<1x128xf32>
    %23 = vector.broadcast %22 : vector<1x128xf32> to vector<8x128xf32>
    %24 = arith.addf %20, %23 : vector<8x128xf32>
    %25 = vector.extract_strided_slice %24 {offsets = [0, 0], sizes = [8, 4], strides = [1, 1]} : vector<8x128xf32> to vector<8x4xf32>
    %c0_20 = arith.constant 0 : index
    %c0_21 = arith.constant 0 : index
    %26 = vector.load %arg5[%c0_20, %c0_21] : memref<8x4xf32, #tpu.memory_space<vmem>>, vector<8x4xf32>
    tpu.vector_store %arg5[%c0_20, %c0_21], %25 {strides = array<i32>} : memref<8x4xf32, #tpu.memory_space<vmem>>, vector<8x4xf32>,
    return
  }
  func.func @transform_0(%arg0: i32) -> (i32, i32) {
    %c0_i32 = arith.constant 0 : i32
    %c0_i32_0 = arith.constant 0 : i32
    return %arg0, %c0_i32 : i32, i32
  }
  func.func @transform_1(%arg0: i32) -> (i32, i32) {
    %c0_i32 = arith.constant 0 : i32
    %c0_i32_0 = arith.constant 0 : i32
    %c0_i32_1 = arith.constant 0 : i32
    return %c0_i32, %c0_i32_0 : i32, i32
  }
  func.func @transform_2(%arg0: i32) -> (i32, i32, i32) {
    %c0_i32 = arith.constant 0 : i32
    %c0_i32_0 = arith.constant 0 : i32
    %c0_i32_1 = arith.constant 0 : i32
    %c0_i32_2 = arith.constant 0 : i32
    return %c0_i32, %c0_i32_0, %c0_i32_1 : i32, i32, i32
  }
  func.func @transform_3(%arg0: i32) -> (i32, i32, i32) {
    %c0_i32 = arith.constant 0 : i32
    %c0_i32_0 = arith.constant 0 : i32
    %c0_i32_1 = arith.constant 0 : i32
    %c0_i32_2 = arith.constant 0 : i32
    return %c0_i32, %c0_i32_0, %c0_i32_1 : i32, i32, i32
  }
  func.func @transform_4(%arg0: i32) -> (i32, i32) {
    %c0_i32 = arith.constant 0 : i32
    %c0_i32_0 = arith.constant 0 : i32
    return %arg0, %c0_i32 : i32, i32
  }
}

</mosaic_0001>

<llo_original>
// kernel: qnetwork_forward.1
$region0: #{qnetwork_forward.1}
  #allocation0 [shape = 'u32[]', space=smem, size = 0x4, offset = 0x4, fixed_abs, tag = 'smem constant byte address 0x4 - core index']
  #allocation1 [shape = 'u32[72,128]{1,0:T(1,128)}', space=vmem, size = 0x9000, scoped, tag = 'internal scratch']
  %s0 = inlined_call_operand.vmem [shape: f32[8,8], index: 0, kind: input, shape index: {}]
  %s1 = inlined_call_operand.vmem [shape: f32[8,128], index: 1, kind: input, shape index: {}]
  %s2 = inlined_call_operand.hbm [shape: f32[2,128,128], index: 2, kind: input, shape index: {}]
  %s3 = inlined_call_operand.vmem [shape: f32[3,1,128], index: 3, kind: input, shape index: {}]
  %s4 = inlined_call_operand.vmem [shape: f32[8,4], index: 4, kind: output, shape index: {}]
  %s5 = sld [smem:[#allocation0]]
  $region30: #{qnetwork_forward.1} parent=0
    _
  %s7 = ssub.s32 1, %s5
  %s8 = scalar_select 0, %s7, %s5
  $region1: #{qnetwork_forward.1} parent=0
    #allocation2 [shape = 'u8[131072]{0}', space=vmem, size = 0x20000, scoped, tag = 'input window, operand 2, single buffered']
    #allocation3 [shape = 's32[1]{0}', space=sflag, size = 0x4, scoped, tag = 'scoped memory for qnetwork_forward.1']
    %9 = vsyncpa [#allocation3], 0
    // Predicated region
    $region2: #{qnetwork_forward.1} parent=1 // pred_check
      _
    $region3: #{qnetwork_forward.1} parent=1 // pred_check_branch
      %11 = sbr.rel (0) target = $region5
    $region4: #{qnetwork_forward.1} parent=1 // pred_region
      _
    $region5: #{qnetwork_forward.1} parent=1 // pred_fallthru
      _
    // Predicated region
    $region6: #{qnetwork_forward.1} parent=1 // pred_check
      _
    $region7: #{qnetwork_forward.1} parent=1 // pred_check_branch
      %13 = sbr.rel (0) target = $region9
    $region8: #{qnetwork_forward.1} parent=1 // pred_region
      _
    $region9: #{qnetwork_forward.1} parent=1 // pred_fallthru
      _
    // Predicated region
    $region10: #{qnetwork_forward.1} parent=1 // pred_check
      _
    $region11: #{qnetwork_forward.1} parent=1 // pred_check_branch
      %15 = sbr.rel (0) target = $region13
    $region12: #{qnetwork_forward.1} parent=1 // pred_region
      %17 = vsyncadd [#allocation3], 0
      %s18 = sshll.u32 %s2, 4
      %s19 = int_to_ptr.hbm [resolvable:$true] %s18
      %s20 = sshll.u32 [#allocation2], 4
      %s21 = int_to_ptr.vmem [resolvable:$true] %s20
      %26 = dma.hbm_to_vmem [thread:$0]  %s19, 4096, %s21, [#allocation3], 128, 128, 8
    $region13: #{qnetwork_forward.1} parent=1 // pred_fallthru
      _
    // Predicated region
    $region14: #{qnetwork_forward.1} parent=1 // pred_check
      _
    $region15: #{qnetwork_forward.1} parent=1 // pred_check_branch
      %28 = sbr.rel (0) target = $region17
    $region16: #{qnetwork_forward.1} parent=1 // pred_region
      _
    $region17: #{qnetwork_forward.1} parent=1 // pred_fallthru
      _
    // Predicated region
    $region18: #{qnetwork_forward.1} parent=1 // pred_check
      _
    $region19: #{qnetwork_forward.1} parent=1 // pred_check_branch
      %30 = sbr.rel (0) target = $region21
    $region20: #{qnetwork_forward.1} parent=1 // pred_region
      %32 = dma.done [#allocation3], 4096
    $region21: #{qnetwork_forward.1} parent=1 // pred_fallthru
      _
    %v33 = vld [vmem:[%s0] sm:$0xff]
    %v34 = vld [vmem:[%s1] sm:$0xff]
    %v35 = vld [vmem:[%s3] sm:$0x1]
    %v37 = vperm.slane %v35, 0
    %vm39 = vcmask 64512
    %v41 = vsel %vm39, %v33, 0
    %43 = vmatpush.msra.mxu0 0.0
    %44 = vmatpush.msra.mxu0 0.0
    %45 = vmatpush.msra.mxu0 0.0
    %46 = vmatpush.msra.mxu0 0.0
    %47 = vmatpush.msra.mxu0 0.0
    %48 = vmatpush.msra.mxu0 0.0
    %49 = vmatpush.msra.mxu0 0.0
    %50 = vmatpush.msra.mxu0 0.0
    %51 = vmatpush.msra.mxu0 0.0
    %52 = vmatpush.msra.mxu0 0.0
    %53 = vmatpush.msra.mxu0 0.0
    %54 = vmatpush.msra.mxu0 0.0
    %55 = vmatpush.msra.mxu0 0.0
    %56 = vmatpush.msra.mxu0 0.0
    %57 = vmatpush.msra.mxu0 0.0
    %58 = vmatpush.msra.mxu0 %v34
    %59 = vmatmul.f32.gmra.mxu0 %v41
    %v60 = vpop.f32.mrf.mxu0
    %v61 = vadd.f32 %v37, %v60
    %62 = vdwg.mxu0
    %v63 = vmax.f32 %v61, 0.0
    %v64 = vld [vmem:[#allocation2] sm:$0xff]
    %v65 = vld [vmem:[#allocation2 + $0x8] sm:$0xff]
    %v66 = vld [vmem:[#allocation2 + $0x10] sm:$0xff]
    %v67 = vld [vmem:[#allocation2 + $0x18] sm:$0xff]
    %v68 = vld [vmem:[#allocation2 + $0x20] sm:$0xff]
    %v69 = vld [vmem:[#allocation2 + $0x28] sm:$0xff]
    %v70 = vld [vmem:[#allocation2 + $0x30] sm:$0xff]
    %v71 = vld [vmem:[#allocation2 + $0x38] sm:$0xff]
    %v72 = vld [vmem:[#allocation2 + $0x40] sm:$0xff]
    %v73 = vld [vmem:[#allocation2 + $0x48] sm:$0xff]
    %v74 = vld [vmem:[#allocation2 + $0x50] sm:$0xff]
    %v75 = vld [vmem:[#allocation2 + $0x58] sm:$0xff]
    %v76 = vld [vmem:[#allocation2 + $0x60] sm:$0xff]
    %v77 = vld [vmem:[#allocation2 + $0x68] sm:$0xff]
    %v78 = vld [vmem:[#allocation2 + $0x70] sm:$0xff]
    %v79 = vld [vmem:[#allocation2 + $0x78] sm:$0xff]
    %s80 = scalar_lea.vmem %s3, 1
    %v81 = vld [vmem:[%s80] sm:$0x1]
    %v83 = vperm.slane %v81, 0
    %85 = vmatpush.msra.mxu0 %v79
    %86 = vmatpush.msra.mxu0 %v78
    %87 = vmatpush.msra.mxu0 %v77
    %88 = vmatpush.msra.mxu0 %v76
    %89 = vmatpush.msra.mxu0 %v75
    %90 = vmatpush.msra.mxu0 %v74
    %91 = vmatpush.msra.mxu0 %v73
    %92 = vmatpush.msra.mxu0 %v72
    %93 = vmatpush.msra.mxu0 %v71
    %94 = vmatpush.msra.mxu0 %v70
    %95 = vmatpush.msra.mxu0 %v69
    %96 = vmatpush.msra.mxu0 %v68
    %97 = vmatpush.msra.mxu0 %v67
    %98 = vmatpush.msra.mxu0 %v66
    %99 = vmatpush.msra.mxu0 %v65
    %100 = vmatpush.msra.mxu0 %v64
    %101 = vmatmul.f32.gmra.mxu0 %v63
    %v102 = vpop.f32.mrf.mxu0
    %v103 = vadd.f32 %v83, %v102
    %104 = vdwg.mxu0
    %v105 = vmax.f32 %v103, 0.0
    %s106 = scalar_lea.vmem [#allocation2], 128
    %v107 = vld [vmem:[%s106] sm:$0xff]
    %v108 = vld [vmem:[%s106 + $0x8] sm:$0xff]
    %v109 = vld [vmem:[%s106 + $0x10] sm:$0xff]
    %v110 = vld [vmem:[%s106 + $0x18] sm:$0xff]
    %v111 = vld [vmem:[%s106 + $0x20] sm:$0xff]
    %v112 = vld [vmem:[%s106 + $0x28] sm:$0xff]
    %v113 = vld [vmem:[%s106 + $0x30] sm:$0xff]
    %v114 = vld [vmem:[%s106 + $0x38] sm:$0xff]
    %v115 = vld [vmem:[%s106 + $0x40] sm:$0xff]
    %v116 = vld [vmem:[%s106 + $0x48] sm:$0xff]
    %v117 = vld [vmem:[%s106 + $0x50] sm:$0xff]
    %v118 = vld [vmem:[%s106 + $0x58] sm:$0xff]
    %v119 = vld [vmem:[%s106 + $0x60] sm:$0xff]
    %v120 = vld [vmem:[%s106 + $0x68] sm:$0xff]
    %v121 = vld [vmem:[%s106 + $0x70] sm:$0xff]
    %v122 = vld [vmem:[%s106 + $0x78] sm:$0xff]
    %s123 = scalar_lea.vmem %s3, 2
    %v124 = vld [vmem:[%s123] sm:$0x1]
    %v126 = vperm.slane %v124, 0
    %128 = vmatpush.msra.mxu0 %v122
    %129 = vmatpush.msra.mxu0 %v121
    %130 = vmatpush.msra.mxu0 %v120
    %131 = vmatpush.msra.mxu0 %v119
    %132 = vmatpush.msra.mxu0 %v118
    %133 = vmatpush.msra.mxu0 %v117
    %134 = vmatpush.msra.mxu0 %v116
    %135 = vmatpush.msra.mxu0 %v115
    %136 = vmatpush.msra.mxu0 %v114
    %137 = vmatpush.msra.mxu0 %v113
    %138 = vmatpush.msra.mxu0 %v112
    %139 = vmatpush.msra.mxu0 %v111
    %140 = vmatpush.msra.mxu0 %v110
    %141 = vmatpush.msra.mxu0 %v109
    %142 = vmatpush.msra.mxu0 %v108
    %143 = vmatpush.msra.mxu0 %v107
    %144 = vmatmul.f32.gmra.mxu0 %v105
    %v145 = vpop.f32.mrf.mxu0
    %v146 = vadd.f32 %v126, %v145
    %147 = vdwg.mxu0
    %vm148 = vcmask 31744
    %149 = vst.msk [vmem:[%s4] sm:$0xff] %vm148, %v146
    // Predicated region
    $region22: #{qnetwork_forward.1} parent=1 // pred_check
      _
    $region23: #{qnetwork_forward.1} parent=1 // pred_check_branch
      %151 = sbr.rel (0) target = $region25
    $region24: #{qnetwork_forward.1} parent=1 // pred_region
      _
    $region25: #{qnetwork_forward.1} parent=1 // pred_fallthru
      _
    // Predicated region
    $region26: #{qnetwork_forward.1} parent=1 // pred_check
      _
    $region27: #{qnetwork_forward.1} parent=1 // pred_check_branch
      %153 = sbr.rel (0) target = $region29
    $region28: #{qnetwork_forward.1} parent=1 // pred_region
      _
    $region29: #{qnetwork_forward.1} parent=1 // pred_fallthru
      _
    %154 = vsyncpa [#allocation3], 1

</llo_original>
